<compile_context>
chip_gen: v6e
topology: v6e:2x2x1
jax: 0.10.0
libtpu: 0.0.40
codegen_flags: <defaults>
</compile_context>

<pallas_src>
import math

import jax
import jax.numpy as jnp
from jax.experimental import pallas as pl
from jax.experimental.pallas import tpu as pltpu


_EMB_BLOCK_BYTES = 1 * 1024 * 1024   # per emb block (double-buffering adds ~2x)
_OUT_BLOCK_BYTES = 2 * 1024 * 1024   # per out block (double-buffering adds ~2x)


def _pick_seq_tile(seq_extent, dim, itemsize, divisor=None):
    """Rows per seq tile: multiple of 8, emb block ~<= 1 MiB, optionally dividing `divisor`."""
    budget = max(8, (_EMB_BLOCK_BYTES // max(1, dim * itemsize)) // 8 * 8)
    if divisor is None:
        rounded = pl.cdiv(seq_extent, 8) * 8  # round seq extent up to a sublane multiple
        return int(min(budget, rounded))
    best = None
    t = 8
    while t <= min(divisor, budget):
        if divisor % t == 0:
            best = t
        t += 8
    if best is None:
        # max_seq_len not a multiple of 8 -> full-table block (equal-to-full-dim is always legal).
        best = divisor
    return int(best)


def _pick_batch_tile(batch, ts, dim, itemsize):
    """Batch rows per out block, keeping the out block ~<= 2 MiB."""
    rows = _OUT_BLOCK_BYTES // max(1, ts * dim * itemsize)
    return int(max(1, min(batch, rows)))


# ---------------------------------------------------------------------------
# main branch (seq < max_seq_len): pure broadcast copy, no scale
# ---------------------------------------------------------------------------
def _copy_kernel(emb_ref, o_ref):
    # emb_ref: (TS, d) rows of the table; o_ref: (tb, TS, d) output tile.
    o_ref[...] = jnp.broadcast_to(emb_ref[...][None, :, :], o_ref.shape)


def _broadcast_copy(emb_weight, batch, seq, ts, tb):
    max_rows, d = emb_weight.shape
    n_tiles = pl.cdiv(seq, ts)
    n_btiles = pl.cdiv(batch, tb)
    itemsize = jnp.dtype(emb_weight.dtype).itemsize
    return pl.pallas_call(
        _copy_kernel,
        out_shape=jax.ShapeDtypeStruct((batch, seq, d), emb_weight.dtype),
        grid=(n_tiles, n_btiles),
        in_specs=[
            pl.BlockSpec((ts, d), lambda i, j: (i, 0)),      # window the full table; j-invariant
        ],
        out_specs=pl.BlockSpec((tb, ts, d), lambda i, j: (j, i, 0)),
        compiler_params=pltpu.CompilerParams(
            dimension_semantics=("parallel", "parallel")),
        cost_estimate=pl.CostEstimate(
            flops=0,
            transcendentals=0,
            bytes_accessed=int((batch * seq * d + min(seq, max_rows) * d) * itemsize)),
    )(emb_weight)


# ---------------------------------------------------------------------------
# overflow branch (seq >= max_seq_len): fused, chunk-scaled broadcast
# ---------------------------------------------------------------------------
def _make_scaled_kernel(tiles_per_chunk):
    def kernel(scale_ref, emb_ref, o_ref):
        # scale_ref: (n_chunks,) f32 in SMEM; emb_ref: (TS, d); o_ref: (tb, TS, d)
        chunk = pl.program_id(0) // tiles_per_chunk
        scaled = (emb_ref[...].astype(jnp.float32) * scale_ref[chunk]).astype(o_ref.dtype)
        o_ref[...] = jnp.broadcast_to(scaled[None, :, :], o_ref.shape)
    return kernel


def _broadcast_scaled(emb_weight, batch, seq, scales, ts, tb, tiles_per_chunk):
    max_rows, d = emb_weight.shape
    n_tiles = pl.cdiv(seq, ts)
    n_btiles = pl.cdiv(batch, tb)
    itemsize = jnp.dtype(emb_weight.dtype).itemsize
    scales_arr = jnp.asarray(scales, dtype=jnp.float32)

    if tiles_per_chunk == 1:
        emb_index_map = lambda i, j: (0, 0)
    else:
        emb_index_map = lambda i, j: (i % tiles_per_chunk, 0)

    return pl.pallas_call(
        _make_scaled_kernel(tiles_per_chunk),
        out_shape=jax.ShapeDtypeStruct((batch, seq, d), emb_weight.dtype),
        grid=(n_tiles, n_btiles),
        in_specs=[
            pl.BlockSpec(memory_space=pltpu.MemorySpace.SMEM),  # per-chunk scales
            pl.BlockSpec((ts, d), emb_index_map),               # table rows, reused per chunk
        ],
        out_specs=pl.BlockSpec((tb, ts, d), lambda i, j: (j, i, 0)),
        compiler_params=pltpu.CompilerParams(
            dimension_semantics=("parallel", "parallel")),
        cost_estimate=pl.CostEstimate(
            flops=int(batch * seq * d),
            transcendentals=0,
            bytes_accessed=int((batch * seq * d + int(n_tiles) * ts * d) * itemsize)),
    )(scales_arr, emb_weight)


# ---------------------------------------------------------------------------
# module forward
# ---------------------------------------------------------------------------
def absolute_positional_embedding(x, emb_weight, max_seq_len):
    """Forward pass matching the PyTorch module.

    x: array whose shape[0]=batch, shape[1]=seq (values are unused).
    emb_weight: (max_seq_len, dim) embedding table.
    """
    b = x.shape[0]
    s = x.shape[1]
    max_rows, d = emb_weight.shape
    assert max_rows == max_seq_len
    itemsize = jnp.dtype(emb_weight.dtype).itemsize

    if s < max_seq_len:
        # positions 0..s-1 are a contiguous window of the table -> tiled broadcast copy
        ts = _pick_seq_tile(s, d, itemsize, divisor=None)
        tb = _pick_batch_tile(b, ts, d, itemsize)
        return _broadcast_copy(emb_weight, b, s, ts, tb)
    else:
        # overflow: the table is reused per chunk of max_seq_len rows with a
        # sqrt(2)-geometric scale; the (possibly empty) remainder chunk uses the
        # final multiplier.  All chunks are emitted by ONE seq-tiled pallas_call.
        # TODO(synk): the PyTorch module also emits warnings.warn here (host-side only).
        n_full = s // max_seq_len
        scales = []
        mult = 1.0 / 2 ** 0.5
        for _ in range(n_full):
            scales.append(mult)
            mult *= 2 ** 0.5
        scales.append(mult)  # remainder chunk

        ts = _pick_seq_tile(max_seq_len, d, itemsize, divisor=max_seq_len)
        tiles_per_chunk = max(1, max_seq_len // ts)
        tb = _pick_batch_tile(b, ts, d, itemsize)
        out = _broadcast_scaled(emb_weight, b, s, scales, ts, tb, tiles_per_chunk)
        assert out.shape[1] == s
        return out


if __name__ == "__main__":
    key = jax.random.PRNGKey(0)
    k_emb, k_x = jax.random.split(key)

    batch, seq, dim, max_seq_len = 2, 8, 32, 16

    # nn.Embedding(max_seq_len, dim) default init: N(0, 1)
    emb_weight = jax.random.normal(k_emb, (max_seq_len, dim), dtype=jnp.float32)

    # x is only inspected for its shape (token ids are typical input)
    x = jax.random.randint(k_x, (batch, seq), 0, 100, dtype=jnp.int32)

    # --- main branch: seq < max_seq_len ---
    out = absolute_positional_embedding(x, emb_weight, max_seq_len)
    out = jax.block_until_ready(out)
    assert out.shape == (batch, seq, dim)
    ref = jnp.broadcast_to(emb_weight[:seq][None], (batch, seq, dim))
    assert jnp.allclose(out, ref, atol=1e-6), "main-branch mismatch"

    # --- overflow branch: seq >= max_seq_len ---
    seq_long = 2 * max_seq_len + 5
    x_long = jax.random.randint(k_x, (batch, seq_long), 0, 100, dtype=jnp.int32)
    out_long = absolute_positional_embedding(x_long, emb_weight, max_seq_len)
    out_long = jax.block_until_ready(out_long)

    mult = 1.0 / math.sqrt(2.0)
    ref_chunks = []
    for _ in range(seq_long // max_seq_len):
        ref_chunks.append(
            jnp.broadcast_to(emb_weight[None], (batch, max_seq_len, dim)) * mult)
        mult *= math.sqrt(2.0)
    rem = seq_long % max_seq_len
    ref_chunks.append(jnp.broadcast_to(emb_weight[:rem][None], (batch, rem, dim)) * mult)
    ref_long = jnp.concatenate(ref_chunks, axis=1)

    assert out_long.shape == (batch, seq_long, dim)
    assert jnp.allclose(out_long, ref_long, atol=1e-5), "overflow-branch mismatch"

    # --- exact-boundary case: seq == max_seq_len (single chunk, scale 1/sqrt(2)) ---
    x_eq = jax.random.randint(k_x, (batch, max_seq_len), 0, 100, dtype=jnp.int32)
    out_eq = absolute_positional_embedding(x_eq, emb_weight, max_seq_len)
    out_eq = jax.block_until_ready(out_eq)
    ref_eq = jnp.broadcast_to(emb_weight[None], (batch, max_seq_len, dim)) / math.sqrt(2.0)
    assert jnp.allclose(out_eq, ref_eq, atol=1e-5), "boundary-case mismatch"

    print("KERNEL_OK")
</pallas_src>

<mosaic_0001>
module attributes {stable_mosaic.version = 11 : i64} {
  func.func @_copy_kernel(%arg0: i32, %arg1: i32, %arg2: memref<8x32xf32, #tpu.memory_space<vmem>>, %arg3: memref<2x8x32xf32, #tpu.memory_space<vmem>>) attributes {dimension_semantics = [#tpu.dimension_semantics<parallel>, #tpu.dimension_semantics<parallel>], iteration_bounds = array<i64: 1, 1>, scalar_prefetch = 0 : i64, scratch_operands = 0 : i64, tpu.core_type = #tpu.core_type<tc>, window_params = [{transform_indices = @transform_0, window_bounds = array<i64: 8, 32>}, {transform_indices = @transform_1, window_bounds = array<i64: 2, 8, 32>}]} {
    %c0 = arith.constant 0 : index
    %c0_0 = arith.constant 0 : index
    %0 = vector.load %arg2[%c0, %c0_0] : memref<8x32xf32, #tpu.memory_space<vmem>>, vector<8x32xf32>
    %1 = vector.shape_cast %0 : vector<8x32xf32> to vector<1x8x32xf32>
    %2 = vector.shape_cast %1 : vector<1x8x32xf32> to vector<1x8x32xf32>
    %3 = vector.broadcast %2 : vector<1x8x32xf32> to vector<2x8x32xf32>
    %c0_1 = arith.constant 0 : index
    %c0_2 = arith.constant 0 : index
    %c0_3 = arith.constant 0 : index
    %4 = vector.load %arg3[%c0_1, %c0_2, %c0_3] : memref<2x8x32xf32, #tpu.memory_space<vmem>>, vector<2x8x32xf32>
    tpu.vector_store %arg3[%c0_1, %c0_2, %c0_3], %3 {strides = array<i32>} : memref<2x8x32xf32, #tpu.memory_space<vmem>>, vector<2x8x32xf32>,
    return
  }
  func.func @transform_0(%arg0: i32, %arg1: i32) -> (i32, i32) {
    %c0_i32 = arith.constant 0 : i32
    %c0_i32_0 = arith.constant 0 : i32
    return %arg0, %c0_i32 : i32, i32
  }
  func.func @transform_1(%arg0: i32, %arg1: i32) -> (i32, i32, i32) {
    %c0_i32 = arith.constant 0 : i32
    %c0_i32_0 = arith.constant 0 : i32
    return %arg1, %arg0, %c0_i32 : i32, i32, i32
  }
}

</mosaic_0001>

<llo_original>
// kernel: tpu_custom_call.1
$region0: #{tpu_custom_call.1}
  #allocation0 [shape = 'u32[]', space=smem, size = 0x4, offset = 0x4, fixed_abs, tag = 'smem constant byte address 0x4 - core index']
  #allocation1 [shape = 'u32[144,128]{1,0:T(1,128)}', space=vmem, size = 0x12000, scoped, tag = 'internal scratch']
  %s0 = inlined_call_operand.hbm [shape: f32[16,32], index: 0, kind: input, shape index: {}]
  %s1 = inlined_call_operand.hbm [shape: f32[2,8,32], index: 1, kind: output, shape index: {}]
  %s2 = sld [smem:[#allocation0]]
  $region18: #{tpu_custom_call.1} parent=0
    _
  %s4 = ssub.s32 1, %s2
  %s5 = scalar_select 0, %s4, %s2
  $region1: #{tpu_custom_call.1} parent=0
    #allocation2 [shape = 'u8[4096]{0}', space=vmem, size = 0x1000, scoped, tag = 'input window, operand 0, single buffered']
    #allocation3 [shape = 's32[1]{0}', space=sflag, size = 0x4, scoped, tag = 'scoped memory for tpu_custom_call.1']
    #allocation4 [shape = 's32[1]{0}', space=sflag, size = 0x4, scoped, tag = 'scoped memory for tpu_custom_call.1']
    #allocation5 [shape = 'u8[8192]{0}', space=vmem, size = 0x2000, scoped, tag = 'output window, operand 0, single buffered']
    %6 = vsyncpa [#allocation3], 0
    %7 = vsyncpa [#allocation4], 0
    // Predicated region
    $region2: #{tpu_custom_call.1} parent=1 // pred_check
      _
    $region3: #{tpu_custom_call.1} parent=1 // pred_check_branch
      %9 = sbr.rel (0) target = $region5
    $region4: #{tpu_custom_call.1} parent=1 // pred_region
      %s11 = ssub.s32 128, 128
      %12 = vsyncadd [#allocation3], %s11
      %s14 = sshll.u32 [#allocation2], 4
      %s15 = int_to_ptr.vmem [resolvable:$true] %s14
      %17 = dma.hbm_to_vmem [thread:$0]  %s0, 128, %s15, [#allocation3]
    $region5: #{tpu_custom_call.1} parent=1 // pred_fallthru
      _
    // Predicated region
    $region6: #{tpu_custom_call.1} parent=1 // pred_check
      _
    $region7: #{tpu_custom_call.1} parent=1 // pred_check_branch
      %19 = sbr.rel (0) target = $region9
    $region8: #{tpu_custom_call.1} parent=1 // pred_region
      %20 = dma.done [#allocation3], 128
    $region9: #{tpu_custom_call.1} parent=1 // pred_fallthru
      _
    %v21 = vld [vmem:[#allocation2] sm:$0xff]
    %vm22 = vcmask 261120
    %23 = vst.msk [vmem:[#allocation5] sm:$0xff] %vm22, %v21
    %24 = vst.msk [vmem:[#allocation5 + $0x8] sm:$0xff] %vm22, %v21
    // Predicated region
    $region10: #{tpu_custom_call.1} parent=1 // pred_check
      _
    $region11: #{tpu_custom_call.1} parent=1 // pred_check_branch
      %26 = sbr.rel (0) target = $region13
    $region12: #{tpu_custom_call.1} parent=1 // pred_region
      %s28 = ssub.s32 256, 256
      %29 = vsyncadd [#allocation4], %s28
      %s30 = sshll.u32 [#allocation5], 4
      %s31 = int_to_ptr.vmem [resolvable:$true] %s30
      %36 = dma.vmem_to_hbm [thread:$0]  %s31, 256, %s1, [#allocation4], 128, 128, 8
    $region13: #{tpu_custom_call.1} parent=1 // pred_fallthru
      _
    // Predicated region
    $region14: #{tpu_custom_call.1} parent=1 // pred_check
      _
    $region15: #{tpu_custom_call.1} parent=1 // pred_check_branch
      %38 = sbr.rel (0) target = $region17
    $region16: #{tpu_custom_call.1} parent=1 // pred_region
      %39 = dma.done [#allocation4], 256
    $region17: #{tpu_custom_call.1} parent=1 // pred_fallthru
      _
    %40 = vsyncpa [#allocation3], 1
    %41 = vsyncpa [#allocation4], 1

</llo_original>
